<compile_context>
chip_gen: v6e
topology: v6e:2x2x1
jax: 0.10.0
libtpu: 0.0.40
codegen_flags: <defaults>
</compile_context>

<pallas_src>
import jax
import jax.numpy as jnp
from jax.experimental import pallas as pl
from jax.experimental.pallas import tpu as pltpu


def _round_up(n, m):
    return ((n + m - 1) // m) * m


def _ib_kernel(x_ref, eps_ref, w_enc_ref, b_enc_ref, w_ms_ref, b_ms_ref,
               w_dec_ref, b_dec_ref, zms_ref, xr_ref):
    bd_p = eps_ref.shape[-1]                      # static (padded bottleneck width)

    # encoder: Linear + ReLU   (bf16 operands on MXU, f32 accumulation)
    x = x_ref[...].astype(jnp.bfloat16)
    h = jnp.dot(x, w_enc_ref[...], preferred_element_type=jnp.float32) + b_enc_ref[...]
    h = jnp.maximum(h, 0.0)

    # fused fc_mu | fc_std projection (single wide matmul); "-5" folded into bias
    ms = jnp.dot(h.astype(jnp.bfloat16), w_ms_ref[...],
                 preferred_element_type=jnp.float32) + b_ms_ref[...]
    mu = ms[:, :bd_p]
    std = jnp.logaddexp(ms[:, bd_p:], 0.0)        # stable softplus, beta=1

    # reparameterize (f32 elementwise)
    z = mu + eps_ref[...] * std

    # decoder
    xr = jnp.dot(z.astype(jnp.bfloat16), w_dec_ref[...],
                 preferred_element_type=jnp.float32) + b_dec_ref[...]

    # lane-dense packed output slab: [ z | mu | std ], each 128-aligned
    zms_ref[:, :bd_p] = z
    zms_ref[:, bd_p:2 * bd_p] = mu
    zms_ref[:, 2 * bd_p:3 * bd_p] = std
    xr_ref[...] = xr


def prepare_params(raw, input_dim, bottleneck_dim):
    """One-time conversion: pad to 128-lane multiples, fuse mu/std, fold -5, cast to bf16."""
    in_p = _round_up(input_dim, 128)
    bd_p = _round_up(bottleneck_dim, 128)

    def pad2(a, r, c):
        return jnp.pad(a, ((0, r - a.shape[0]), (0, c - a.shape[1])))

    w_enc = pad2(raw["w_enc"], in_p, in_p).astype(jnp.bfloat16)
    b_enc = pad2(raw["b_enc"], 1, in_p)

    w_ms = jnp.concatenate(
        [pad2(raw["w_mu"], in_p, bd_p), pad2(raw["w_std"], in_p, bd_p)],
        axis=1).astype(jnp.bfloat16)
    b_ms = jnp.concatenate(
        [pad2(raw["b_mu"], 1, bd_p), pad2(raw["b_std"] - 5.0, 1, bd_p)], axis=1)

    w_dec = pad2(raw["w_dec"], bd_p, in_p).astype(jnp.bfloat16)
    b_dec = pad2(raw["b_dec"], 1, in_p)

    return dict(w_enc=w_enc, b_enc=b_enc, w_ms=w_ms, b_ms=b_ms,
                w_dec=w_dec, b_dec=b_dec,
                input_dim=input_dim, bottleneck_dim=bottleneck_dim,
                in_p=in_p, bd_p=bd_p)


def information_bottleneck_forward(x, prepared, eps, *, block_b=256):
    """x: [B, input_dim] f32, eps: [B, bottleneck_dim] f32 (~N(0,1))."""
    B, input_dim = x.shape
    bd = prepared["bottleneck_dim"]
    in_p, bd_p = prepared["in_p"], prepared["bd_p"]
    assert input_dim == prepared["input_dim"]
    assert eps.shape == (B, bd)

    # batch tile: multiple of 8 sublanes, capped by block_b
    tb = min(_round_up(B, 8), _round_up(block_b, 8))
    b_pad = _round_up(B, tb)
    grid = (b_pad // tb,)

    x_p = jnp.pad(x.astype(jnp.float32), ((0, b_pad - B), (0, in_p - input_dim)))
    eps_p = jnp.pad(eps.astype(jnp.float32), ((0, b_pad - B), (0, bd_p - bd)))

    row = lambda i: (i, 0)     # batch-tiled arrays
    rep = lambda i: (0, 0)     # resident weights / biases

    in_specs = [
        pl.BlockSpec((tb, in_p), row),         # x
        pl.BlockSpec((tb, bd_p), row),         # eps
        pl.BlockSpec((in_p, in_p), rep),       # w_enc (bf16)
        pl.BlockSpec((1, in_p), rep),          # b_enc
        pl.BlockSpec((in_p, 2 * bd_p), rep),   # fused w_mu|w_std (bf16)
        pl.BlockSpec((1, 2 * bd_p), rep),      # fused b_mu|(b_std-5)
        pl.BlockSpec((bd_p, in_p), rep),       # w_dec (bf16)
        pl.BlockSpec((1, in_p), rep),          # b_dec
    ]
    out_specs = (
        pl.BlockSpec((tb, 3 * bd_p), row),     # packed [z | mu | std]
        pl.BlockSpec((tb, in_p), row),         # x_reconstructed
    )
    out_shape = (
        jax.ShapeDtypeStruct((b_pad, 3 * bd_p), jnp.float32),
        jax.ShapeDtypeStruct((b_pad, in_p), jnp.float32),
    )

    # VMEM budget: resident bf16 weights + f32 biases + double-buffered tiles.
    w_bytes = (in_p * in_p + in_p * 2 * bd_p + bd_p * in_p) * 2 \
              + (4 * in_p + 2 * bd_p) * 4
    act_bytes = tb * (in_p + bd_p + 3 * bd_p + in_p) * 4
    vmem_limit = int(min(max(w_bytes + 2 * act_bytes + (8 << 20), 32 << 20), 64 << 20))
    # TODO(synk): if bf16 weights alone exceed ~48 MiB (input_dim >= ~4096 on v7x's
    # 64 MiB VMEM), stream w_enc/w_dec from HBM (pl.ANY + emit_pipeline) instead of
    # keeping them VMEM-resident.

    zms, xr = pl.pallas_call(
        _ib_kernel,
        out_shape=out_shape,
        grid=grid,
        in_specs=in_specs,
        out_specs=out_specs,
        compiler_params=pltpu.CompilerParams(
            dimension_semantics=("parallel",),
            vmem_limit_bytes=vmem_limit,
        ),
    )(x_p, eps_p,
      prepared["w_enc"], prepared["b_enc"],
      prepared["w_ms"], prepared["b_ms"],
      prepared["w_dec"], prepared["b_dec"])

    z = zms[:B, :bd]
    mu = zms[:B, bd_p:bd_p + bd]
    std = zms[:B, 2 * bd_p:2 * bd_p + bd]
    x_rec = xr[:B, :input_dim]
    return z, x_rec, mu, std


def init_params(key, input_dim, bottleneck_dim):
    """PyTorch-style uniform(-1/sqrt(fan_in), 1/sqrt(fan_in)) init.
    Weights stored as [in_dim, out_dim] (already transposed for x @ W)."""
    def linear_init(k, fan_in, fan_out):
        kw, kb = jax.random.split(k)
        bound = 1.0 / jnp.sqrt(fan_in)
        w = jax.random.uniform(kw, (fan_in, fan_out), jnp.float32, -bound, bound)
        b = jax.random.uniform(kb, (1, fan_out), jnp.float32, -bound, bound)
        return w, b

    k_enc, k_mu, k_std, k_dec = jax.random.split(key, 4)
    w_enc, b_enc = linear_init(k_enc, input_dim, input_dim)
    w_mu, b_mu = linear_init(k_mu, input_dim, bottleneck_dim)
    w_std, b_std = linear_init(k_std, input_dim, bottleneck_dim)
    w_dec, b_dec = linear_init(k_dec, bottleneck_dim, input_dim)
    return dict(w_enc=w_enc, b_enc=b_enc, w_mu=w_mu, b_mu=b_mu,
                w_std=w_std, b_std=b_std, w_dec=w_dec, b_dec=b_dec)


def reference_forward_f32(x, raw, eps):
    """Pure-f32 reference (module semantics)."""
    h = jnp.maximum(x @ raw["w_enc"] + raw["b_enc"], 0.0)
    mu = h @ raw["w_mu"] + raw["b_mu"]
    std = jax.nn.softplus((h @ raw["w_std"] + raw["b_std"]) - 5.0)
    z = mu + eps * std
    xr = z @ raw["w_dec"] + raw["b_dec"]
    return z, xr, mu, std


def reference_forward_bf16(x, raw, eps):
    """Reference mirroring the kernel's bf16-operand / f32-accumulate matmuls."""
    bf = lambda a: a.astype(jnp.bfloat16)
    h = jnp.maximum(
        jnp.dot(bf(x), bf(raw["w_enc"]), preferred_element_type=jnp.float32)
        + raw["b_enc"], 0.0)
    mu = jnp.dot(bf(h), bf(raw["w_mu"]), preferred_element_type=jnp.float32) + raw["b_mu"]
    pre = (jnp.dot(bf(h), bf(raw["w_std"]), preferred_element_type=jnp.float32)
           + raw["b_std"]) - 5.0
    std = jnp.logaddexp(pre, 0.0)
    z = mu + eps * std
    xr = jnp.dot(bf(z), bf(raw["w_dec"]), preferred_element_type=jnp.float32) + raw["b_dec"]
    return z, xr, mu, std


if __name__ == "__main__":
    B, INPUT_DIM, BOTTLENECK_DIM = 8, 32, 16

    key = jax.random.PRNGKey(0)
    k_x, k_eps, k_p = jax.random.split(key, 3)

    x = jax.random.normal(k_x, (B, INPUT_DIM), jnp.float32)
    # eps ~ randn_like(std): generated in the wrapper (deterministic), consumed in-kernel.
    eps = jax.random.normal(k_eps, (B, BOTTLENECK_DIM), jnp.float32)

    raw = init_params(k_p, INPUT_DIM, BOTTLENECK_DIM)
    prepared = prepare_params(raw, INPUT_DIM, BOTTLENECK_DIM)

    z, xr, mu, std = information_bottleneck_forward(x, prepared, eps)
    jax.block_until_ready((z, xr, mu, std))

    # tight check against a reference that mirrors the kernel's bf16 matmul operands
    z_m, xr_m, mu_m, std_m = reference_forward_bf16(x, raw, eps)
    for a, b in [(z, z_m), (xr, xr_m), (mu, mu_m), (std, std_m)]:
        assert jnp.allclose(a, b, atol=2e-3, rtol=2e-3)

    # loose check against the pure-f32 module semantics
    z_r, xr_r, mu_r, std_r = reference_forward_f32(x, raw, eps)
    for a, b in [(z, z_r), (xr, xr_r), (mu, mu_r), (std, std_r)]:
        assert jnp.allclose(a, b, atol=5e-2, rtol=5e-2)

    print("KERNEL_OK")
</pallas_src>

<mosaic_0001>
module attributes {stable_mosaic.version = 11 : i64} {
  func.func @_ib_kernel(%arg0: i32, %arg1: memref<8x128xf32, #tpu.memory_space<vmem>>, %arg2: memref<8x128xf32, #tpu.memory_space<vmem>>, %arg3: memref<128x128xbf16, #tpu.memory_space<vmem>>, %arg4: memref<1x128xf32, #tpu.memory_space<vmem>>, %arg5: memref<128x256xbf16, #tpu.memory_space<vmem>>, %arg6: memref<1x256xf32, #tpu.memory_space<vmem>>, %arg7: memref<128x128xbf16, #tpu.memory_space<vmem>>, %arg8: memref<1x128xf32, #tpu.memory_space<vmem>>, %arg9: memref<8x384xf32, #tpu.memory_space<vmem>>, %arg10: memref<8x128xf32, #tpu.memory_space<vmem>>) attributes {dimension_semantics = [#tpu.dimension_semantics<parallel>], iteration_bounds = array<i64: 1>, scalar_prefetch = 0 : i64, scratch_operands = 0 : i64, tpu.core_type = #tpu.core_type<tc>, window_params = [{transform_indices = @transform_0, window_bounds = array<i64: 8, 128>}, {transform_indices = @transform_1, window_bounds = array<i64: 8, 128>}, {pipeline_mode = #tpu.pipeline_mode<synchronous>, transform_indices = @transform_2, window_bounds = array<i64: 128, 128>}, {pipeline_mode = #tpu.pipeline_mode<synchronous>, transform_indices = @transform_3, window_bounds = array<i64: 1, 128>}, {pipeline_mode = #tpu.pipeline_mode<synchronous>, transform_indices = @transform_4, window_bounds = array<i64: 128, 256>}, {pipeline_mode = #tpu.pipeline_mode<synchronous>, transform_indices = @transform_5, window_bounds = array<i64: 1, 256>}, {pipeline_mode = #tpu.pipeline_mode<synchronous>, transform_indices = @transform_6, window_bounds = array<i64: 128, 128>}, {pipeline_mode = #tpu.pipeline_mode<synchronous>, transform_indices = @transform_7, window_bounds = array<i64: 1, 128>}, {transform_indices = @transform_8, window_bounds = array<i64: 8, 384>}, {transform_indices = @transform_9, window_bounds = array<i64: 8, 128>}]} {
    %c0 = arith.constant 0 : index
    %c0_0 = arith.constant 0 : index
    %0 = vector.load %arg1[%c0, %c0_0] : memref<8x128xf32, #tpu.memory_space<vmem>>, vector<8x128xf32>
    %1 = arith.truncf %0 : vector<8x128xf32> to vector<8x128xbf16>
    %c0_1 = arith.constant 0 : index
    %c0_2 = arith.constant 0 : index
    %2 = vector.load %arg3[%c0_1, %c0_2] : memref<128x128xbf16, #tpu.memory_space<vmem>>, vector<128x128xbf16>
    %cst = arith.constant dense<0.000000e+00> : vector<8x128xf32>
    %3 = tpu.matmul %1, %2, %cst {dimension_numbers = #tpu.dot_dimension_numbers<[1], [0], [0], [1], [0, 0, 1, 1], [], []>} : vector<8x128xbf16>, vector<128x128xbf16>, vector<8x128xf32> -> vector<8x128xf32>
    %c0_3 = arith.constant 0 : index
    %c0_4 = arith.constant 0 : index
    %4 = vector.load %arg4[%c0_3, %c0_4] : memref<1x128xf32, #tpu.memory_space<vmem>>, vector<1x128xf32>
    %5 = vector.broadcast %4 : vector<1x128xf32> to vector<8x128xf32>
    %6 = arith.addf %3, %5 : vector<8x128xf32>
    %cst_5 = arith.constant 0.000000e+00 : f32
    %7 = vector.broadcast %cst_5 : f32 to vector<8x128xf32>
    %8 = arith.maximumf %6, %7 : vector<8x128xf32>
    %9 = arith.truncf %8 : vector<8x128xf32> to vector<8x128xbf16>
    %c0_6 = arith.constant 0 : index
    %c0_7 = arith.constant 0 : index
    %10 = vector.load %arg5[%c0_6, %c0_7] : memref<128x256xbf16, #tpu.memory_space<vmem>>, vector<128x256xbf16>
    %cst_8 = arith.constant dense<0.000000e+00> : vector<8x256xf32>
    %11 = tpu.matmul %9, %10, %cst_8 {dimension_numbers = #tpu.dot_dimension_numbers<[1], [0], [0], [1], [0, 0, 1, 1], [], []>} : vector<8x128xbf16>, vector<128x256xbf16>, vector<8x256xf32> -> vector<8x256xf32>
    %c0_9 = arith.constant 0 : index
    %c0_10 = arith.constant 0 : index
    %12 = vector.load %arg6[%c0_9, %c0_10] : memref<1x256xf32, #tpu.memory_space<vmem>>, vector<1x256xf32>
    %13 = vector.broadcast %12 : vector<1x256xf32> to vector<8x256xf32>
    %14 = arith.addf %11, %13 : vector<8x256xf32>
    %15 = vector.extract_strided_slice %14 {offsets = [0, 0], sizes = [8, 128], strides = [1, 1]} : vector<8x256xf32> to vector<8x128xf32>
    %16 = vector.extract_strided_slice %14 {offsets = [0, 128], sizes = [8, 128], strides = [1, 1]} : vector<8x256xf32> to vector<8x128xf32>
    %cst_11 = arith.constant 0.000000e+00 : f32
    %17 = vector.broadcast %cst_11 : f32 to vector<8x128xf32>
    %18 = arith.maximumf %16, %17 : vector<8x128xf32>
    %19 = vector.broadcast %cst_11 : f32 to vector<8x128xf32>
    %20 = arith.subf %16, %19 : vector<8x128xf32>
    %21 = arith.cmpf one, %20, %20 : vector<8x128xf32>
    %22 = vector.broadcast %cst_11 : f32 to vector<8x128xf32>
    %23 = arith.addf %16, %22 : vector<8x128xf32>
    %24 = math.absf %20 : vector<8x128xf32>
    %cst_12 = arith.constant 0.000000e+00 : f32
    %25 = vector.broadcast %cst_12 : f32 to vector<8x128xf32>
    %26 = arith.subf %25, %24 : vector<8x128xf32>
    %27 = math.exp %26 : vector<8x128xf32>
    %28 = math.log1p %27 : vector<8x128xf32>
    %29 = arith.addf %18, %28 : vector<8x128xf32>
    %30 = arith.select %21, %23, %29 : vector<8x128xi1>, vector<8x128xf32>
    %c0_13 = arith.constant 0 : index
    %c0_14 = arith.constant 0 : index
    %31 = vector.load %arg2[%c0_13, %c0_14] : memref<8x128xf32, #tpu.memory_space<vmem>>, vector<8x128xf32>
    %32 = arith.mulf %31, %30 : vector<8x128xf32>
    %33 = arith.addf %15, %32 : vector<8x128xf32>
    %34 = arith.truncf %33 : vector<8x128xf32> to vector<8x128xbf16>
    %c0_15 = arith.constant 0 : index
    %c0_16 = arith.constant 0 : index
    %35 = vector.load %arg7[%c0_15, %c0_16] : memref<128x128xbf16, #tpu.memory_space<vmem>>, vector<128x128xbf16>
    %cst_17 = arith.constant dense<0.000000e+00> : vector<8x128xf32>
    %36 = tpu.matmul %34, %35, %cst_17 {dimension_numbers = #tpu.dot_dimension_numbers<[1], [0], [0], [1], [0, 0, 1, 1], [], []>} : vector<8x128xbf16>, vector<128x128xbf16>, vector<8x128xf32> -> vector<8x128xf32>
    %c0_18 = arith.constant 0 : index
    %c0_19 = arith.constant 0 : index
    %37 = vector.load %arg8[%c0_18, %c0_19] : memref<1x128xf32, #tpu.memory_space<vmem>>, vector<1x128xf32>
    %38 = vector.broadcast %37 : vector<1x128xf32> to vector<8x128xf32>
    %39 = arith.addf %36, %38 : vector<8x128xf32>
    %c0_20 = arith.constant 0 : index
    %c0_21 = arith.constant 0 : index
    %40 = vector.load %arg9[%c0_20, %c0_21] : memref<8x384xf32, #tpu.memory_space<vmem>>, vector<8x128xf32>
    tpu.vector_store %arg9[%c0_20, %c0_21], %33 {strides = array<i32>} : memref<8x384xf32, #tpu.memory_space<vmem>>, vector<8x128xf32>,
    %c0_22 = arith.constant 0 : index
    %c128 = arith.constant 128 : index
    %41 = vector.load %arg9[%c0_22, %c128] : memref<8x384xf32, #tpu.memory_space<vmem>>, vector<8x128xf32>
    tpu.vector_store %arg9[%c0_22, %c128], %15 {strides = array<i32>} : memref<8x384xf32, #tpu.memory_space<vmem>>, vector<8x128xf32>,
    %c0_23 = arith.constant 0 : index
    %c256 = arith.constant 256 : index
    %42 = vector.load %arg9[%c0_23, %c256] : memref<8x384xf32, #tpu.memory_space<vmem>>, vector<8x128xf32>
    tpu.vector_store %arg9[%c0_23, %c256], %30 {strides = array<i32>} : memref<8x384xf32, #tpu.memory_space<vmem>>, vector<8x128xf32>,
    %c0_24 = arith.constant 0 : index
    %c0_25 = arith.constant 0 : index
    %43 = vector.load %arg10[%c0_24, %c0_25] : memref<8x128xf32, #tpu.memory_space<vmem>>, vector<8x128xf32>
    tpu.vector_store %arg10[%c0_24, %c0_25], %39 {strides = array<i32>} : memref<8x128xf32, #tpu.memory_space<vmem>>, vector<8x128xf32>,
    return
  }
  func.func @transform_0(%arg0: i32) -> (i32, i32) {
    %c0_i32 = arith.constant 0 : i32
    %c0_i32_0 = arith.constant 0 : i32
    return %arg0, %c0_i32 : i32, i32
  }
  func.func @transform_1(%arg0: i32) -> (i32, i32) {
    %c0_i32 = arith.constant 0 : i32
    %c0_i32_0 = arith.constant 0 : i32
    return %arg0, %c0_i32 : i32, i32
  }
  func.func @transform_2(%arg0: i32) -> (i32, i32) {
    %c0_i32 = arith.constant 0 : i32
    %c0_i32_0 = arith.constant 0 : i32
    %c0_i32_1 = arith.constant 0 : i32
    return %c0_i32, %c0_i32_0 : i32, i32
  }
  func.func @transform_3(%arg0: i32) -> (i32, i32) {
    %c0_i32 = arith.constant 0 : i32
    %c0_i32_0 = arith.constant 0 : i32
    %c0_i32_1 = arith.constant 0 : i32
    return %c0_i32, %c0_i32_0 : i32, i32
  }
  func.func @transform_4(%arg0: i32) -> (i32, i32) {
    %c0_i32 = arith.constant 0 : i32
    %c0_i32_0 = arith.constant 0 : i32
    %c0_i32_1 = arith.constant 0 : i32
    return %c0_i32, %c0_i32_0 : i32, i32
  }
  func.func @transform_5(%arg0: i32) -> (i32, i32) {
    %c0_i32 = arith.constant 0 : i32
    %c0_i32_0 = arith.constant 0 : i32
    %c0_i32_1 = arith.constant 0 : i32
    return %c0_i32, %c0_i32_0 : i32, i32
  }
  func.func @transform_6(%arg0: i32) -> (i32, i32) {
    %c0_i32 = arith.constant 0 : i32
    %c0_i32_0 = arith.constant 0 : i32
    %c0_i32_1 = arith.constant 0 : i32
    return %c0_i32, %c0_i32_0 : i32, i32
  }
  func.func @transform_7(%arg0: i32) -> (i32, i32) {
    %c0_i32 = arith.constant 0 : i32
    %c0_i32_0 = arith.constant 0 : i32
    %c0_i32_1 = arith.constant 0 : i32
    return %c0_i32, %c0_i32_0 : i32, i32
  }
  func.func @transform_8(%arg0: i32) -> (i32, i32) {
    %c0_i32 = arith.constant 0 : i32
    %c0_i32_0 = arith.constant 0 : i32
    return %arg0, %c0_i32 : i32, i32
  }
  func.func @transform_9(%arg0: i32) -> (i32, i32) {
    %c0_i32 = arith.constant 0 : i32
    %c0_i32_0 = arith.constant 0 : i32
    return %arg0, %c0_i32 : i32, i32
  }
}

</mosaic_0001>

<llo_original>
// kernel: tpu_custom_call.1
$region0: #{tpu_custom_call.1}
  #allocation0 [shape = 'u32[]', space=smem, size = 0x4, offset = 0x4, fixed_abs, tag = 'smem constant byte address 0x4 - core index']
  #allocation1 [shape = 'u32[144,128]{1,0:T(1,128)}', space=vmem, size = 0x12000, scoped, tag = 'internal scratch']
  %s0 = inlined_call_operand.hbm [shape: f32[8,128], index: 0, kind: input, shape index: {}]
  %s1 = inlined_call_operand.hbm [shape: f32[8,128], index: 1, kind: input, shape index: {}]
  %s2 = inlined_call_operand.hbm [shape: bf16[128,128], index: 2, kind: input, shape index: {}]
  %s3 = inlined_call_operand.vmem [shape: f32[1,128], index: 3, kind: input, shape index: {}]
  %s4 = inlined_call_operand.hbm [shape: bf16[128,256], index: 4, kind: input, shape index: {}]
  %s5 = inlined_call_operand.vmem [shape: f32[1,256], index: 5, kind: input, shape index: {}]
  %s6 = inlined_call_operand.hbm [shape: bf16[128,128], index: 6, kind: input, shape index: {}]
  %s7 = inlined_call_operand.vmem [shape: f32[1,128], index: 7, kind: input, shape index: {}]
  %s8 = inlined_call_operand.hbm [shape: f32[8,384], index: 8, kind: output, shape index: {0}]
  %s9 = inlined_call_operand.hbm [shape: f32[8,128], index: 9, kind: output, shape index: {1}]
  %10 = xla_tuple %s8, %s9
  %s11 = sld [smem:[#allocation0]]
  $region70: #{tpu_custom_call.1} parent=0
    _
  %s13 = ssub.s32 1, %s11
  %s14 = scalar_select 0, %s13, %s11
  $region1: #{tpu_custom_call.1} parent=0
    #allocation2 [shape = 'u8[4096]{0}', space=vmem, size = 0x1000, scoped, tag = 'input window, operand 0, single buffered']
    #allocation3 [shape = 's32[1]{0}', space=sflag, size = 0x4, scoped, tag = 'scoped memory for tpu_custom_call.1']
    #allocation4 [shape = 's32[1]{0}', space=sflag, size = 0x4, scoped, tag = 'scoped memory for tpu_custom_call.1']
    #allocation5 [shape = 'u8[4096]{0}', space=vmem, size = 0x1000, scoped, tag = 'input window, operand 1, single buffered']
    #allocation6 [shape = 's32[1]{0}', space=sflag, size = 0x4, scoped, tag = 'scoped memory for tpu_custom_call.1']
    #allocation7 [shape = 'u8[32768]{0}', space=vmem, size = 0x8000, scoped, tag = 'input window, operand 2, single buffered']
    #allocation8 [shape = 'u8[65536]{0}', space=vmem, size = 0x10000, scoped, tag = 'input window, operand 4, single buffered']
    #allocation9 [shape = 's32[1]{0}', space=sflag, size = 0x4, scoped, tag = 'scoped memory for tpu_custom_call.1']
    #allocation10 [shape = 'u8[32768]{0}', space=vmem, size = 0x8000, scoped, tag = 'input window, operand 6, single buffered']
    #allocation11 [shape = 'u8[12288]{0}', space=vmem, size = 0x3000, scoped, tag = 'output window, operand 0, single buffered']
    #allocation12 [shape = 'u8[4096]{0}', space=vmem, size = 0x1000, scoped, tag = 'output window, operand 1, single buffered']
    #allocation13 [shape = 's32[1]{0}', space=sflag, size = 0x4, scoped, tag = 'scoped memory for tpu_custom_call.1']
    %15 = vsyncpa [#allocation3], 0
    %16 = vsyncpa [#allocation6], 0
    %17 = vsyncpa [#allocation9], 0
    %18 = vsyncpa [#allocation4], 0
    %19 = vsyncpa [#allocation13], 0
    // Predicated region
    $region2: #{tpu_custom_call.1} parent=1 // pred_check
      _
    $region3: #{tpu_custom_call.1} parent=1 // pred_check_branch
      %21 = sbr.rel (0) target = $region5
    $region4: #{tpu_custom_call.1} parent=1 // pred_region
      %s23 = ssub.s32 128, 128
      %24 = vsyncadd [#allocation3], %s23
      %s26 = sshll.u32 [#allocation2], 4
      %s27 = int_to_ptr.vmem [resolvable:$true] %s26
      %29 = dma.hbm_to_vmem [thread:$0]  %s0, 128, %s27, [#allocation3]
    $region5: #{tpu_custom_call.1} parent=1 // pred_fallthru
      _
    // Predicated region
    $region6: #{tpu_custom_call.1} parent=1 // pred_check
      _
    $region7: #{tpu_custom_call.1} parent=1 // pred_check_branch
      %31 = sbr.rel (0) target = $region9
    $region8: #{tpu_custom_call.1} parent=1 // pred_region
      %s33 = ssub.s32 128, 128
      %34 = vsyncadd [#allocation6], %s33
      %s36 = sshll.u32 [#allocation5], 4
      %s37 = int_to_ptr.vmem [resolvable:$true] %s36
      %39 = dma.hbm_to_vmem [thread:$0]  %s1, 128, %s37, [#allocation6]
    $region9: #{tpu_custom_call.1} parent=1 // pred_fallthru
      _
    // Predicated region
    $region10: #{tpu_custom_call.1} parent=1 // pred_check
      _
    $region11: #{tpu_custom_call.1} parent=1 // pred_check_branch
      %41 = sbr.rel (0) target = $region13
    $region12: #{tpu_custom_call.1} parent=1 // pred_region
      %s43 = ssub.s32 1024, 1024
      %44 = vsyncadd [#allocation6], %s43
      %s45 = sshll.u32 [#allocation7], 4
      %s46 = int_to_ptr.vmem [resolvable:$true] %s45
      %51 = dma.hbm_to_vmem [thread:$0]  %s2, 1024, %s46, [#allocation6], 64, 64, 4
    $region13: #{tpu_custom_call.1} parent=1 // pred_fallthru
      _
    // Predicated region
    $region14: #{tpu_custom_call.1} parent=1 // pred_check
      _
    $region15: #{tpu_custom_call.1} parent=1 // pred_check_branch
      %53 = sbr.rel (0) target = $region17
    $region16: #{tpu_custom_call.1} parent=1 // pred_region
      _
    $region17: #{tpu_custom_call.1} parent=1 // pred_fallthru
      _
    // Predicated region
    $region18: #{tpu_custom_call.1} parent=1 // pred_check
      _
    $region19: #{tpu_custom_call.1} parent=1 // pred_check_branch
      %55 = sbr.rel (0) target = $region21
    $region20: #{tpu_custom_call.1} parent=1 // pred_region
      %s57 = ssub.s32 2048, 2048
      %58 = vsyncadd [#allocation9], %s57
      %s59 = sshll.u32 [#allocation8], 4
      %s60 = int_to_ptr.vmem [resolvable:$true] %s59
      %65 = dma.hbm_to_vmem [thread:$0]  %s4, 2048, %s60, [#allocation9], 128, 128, 8
    $region21: #{tpu_custom_call.1} parent=1 // pred_fallthru
      _
    // Predicated region
    $region22: #{tpu_custom_call.1} parent=1 // pred_check
      _
    $region23: #{tpu_custom_call.1} parent=1 // pred_check_branch
      %67 = sbr.rel (0) target = $region25
    $region24: #{tpu_custom_call.1} parent=1 // pred_region
      _
    $region25: #{tpu_custom_call.1} parent=1 // pred_fallthru
      _
    // Predicated region
    $region26: #{tpu_custom_call.1} parent=1 // pred_check
      _
    $region27: #{tpu_custom_call.1} parent=1 // pred_check_branch
      %69 = sbr.rel (0) target = $region29
    $region28: #{tpu_custom_call.1} parent=1 // pred_region
      %s71 = ssub.s32 1024, 1024
      %72 = vsyncadd [#allocation9], %s71
      %s73 = sshll.u32 [#allocation10], 4
      %s74 = int_to_ptr.vmem [resolvable:$true] %s73
      %79 = dma.hbm_to_vmem [thread:$0]  %s6, 1024, %s74, [#allocation9], 64, 64, 4
    $region29: #{tpu_custom_call.1} parent=1 // pred_fallthru
      _
    // Predicated region
    $region30: #{tpu_custom_call.1} parent=1 // pred_check
      _
    $region31: #{tpu_custom_call.1} parent=1 // pred_check_branch
      %81 = sbr.rel (0) target = $region33
    $region32: #{tpu_custom_call.1} parent=1 // pred_region
      _
    $region33: #{tpu_custom_call.1} parent=1 // pred_fallthru
      _
    // Predicated region
    $region34: #{tpu_custom_call.1} parent=1 // pred_check
      _
    $region35: #{tpu_custom_call.1} parent=1 // pred_check_branch
      %83 = sbr.rel (0) target = $region37
    $region36: #{tpu_custom_call.1} parent=1 // pred_region
      %84 = dma.done [#allocation3], 128
    $region37: #{tpu_custom_call.1} parent=1 // pred_fallthru
      _
    // Predicated region
    $region38: #{tpu_custom_call.1} parent=1 // pred_check
      _
    $region39: #{tpu_custom_call.1} parent=1 // pred_check_branch
      %86 = sbr.rel (0) target = $region41
    $region40: #{tpu_custom_call.1} parent=1 // pred_region
      %87 = dma.done [#allocation6], 128
    $region41: #{tpu_custom_call.1} parent=1 // pred_fallthru
      _
    // Predicated region
    $region42: #{tpu_custom_call.1} parent=1 // pred_check
      _
    $region43: #{tpu_custom_call.1} parent=1 // pred_check_branch
      %89 = sbr.rel (0) target = $region45
    $region44: #{tpu_custom_call.1} parent=1 // pred_region
      %90 = dma.done [#allocation6], 1024
    $region45: #{tpu_custom_call.1} parent=1 // pred_fallthru
      _
    // Predicated region
    $region46: #{tpu_custom_call.1} parent=1 // pred_check
      _
    $region47: #{tpu_custom_call.1} parent=1 // pred_check_branch
      %92 = sbr.rel (0) target = $region49
    $region48: #{tpu_custom_call.1} parent=1 // pred_region
      %93 = dma.done [#allocation9], 2048
    $region49: #{tpu_custom_call.1} parent=1 // pred_fallthru
      _
    // Predicated region
    $region50: #{tpu_custom_call.1} parent=1 // pred_check
      _
    $region51: #{tpu_custom_call.1} parent=1 // pred_check_branch
      %95 = sbr.rel (0) target = $region53
    $region52: #{tpu_custom_call.1} parent=1 // pred_region
      %96 = dma.done [#allocation9], 1024
    $region53: #{tpu_custom_call.1} parent=1 // pred_fallthru
      _
    %v98 = vld [vmem:[#allocation2] sm:$0xff]
    %v99 = vpack.c.bf16 %v98, %v98
    %v100 = vld [vmem:[#allocation7] sm:$0xf]
    %v101 = vld [vmem:[#allocation7 + $0x4] sm:$0xf]
    %v102 = vld [vmem:[#allocation7 + $0x8] sm:$0xf]
    %v103 = vld [vmem:[#allocation7 + $0xc] sm:$0xf]
    %v104 = vld [vmem:[#allocation7 + $0x10] sm:$0xf]
    %v105 = vld [vmem:[#allocation7 + $0x14] sm:$0xf]
    %v106 = vld [vmem:[#allocation7 + $0x18] sm:$0xf]
    %v107 = vld [vmem:[#allocation7 + $0x1c] sm:$0xf]
    %v108 = vld [vmem:[#allocation7 + $0x20] sm:$0xf]
    %v109 = vld [vmem:[#allocation7 + $0x24] sm:$0xf]
    %v110 = vld [vmem:[#allocation7 + $0x28] sm:$0xf]
    %v111 = vld [vmem:[#allocation7 + $0x2c] sm:$0xf]
    %v112 = vld [vmem:[#allocation7 + $0x30] sm:$0xf]
    %v113 = vld [vmem:[#allocation7 + $0x34] sm:$0xf]
    %v114 = vld [vmem:[#allocation7 + $0x38] sm:$0xf]
    %v115 = vld [vmem:[#allocation7 + $0x3c] sm:$0xf]
    %v116 = vld [vmem:[%s3] sm:$0x1]
    %v118 = vlaneseq
    %v119 = vshrl.u32 %v118, 7
    %v120 = vsub.s32 0, %v119
    %v121 = vrot.slane %v116, %v120
    %v139 = vunpack.c.l.b16 %v100
    %v140 = vunpack.c.l.b16 %v101
    %v141 = vunpack.c.l.b16 %v102
    %v142 = vunpack.c.l.b16 %v103
    %v143 = vunpack.c.l.b16 %v104
    %v144 = vunpack.c.l.b16 %v105
    %v145 = vunpack.c.l.b16 %v106
    %v146 = vunpack.c.l.b16 %v107
    %v147 = vunpack.c.l.b16 %v108
    %v148 = vunpack.c.l.b16 %v109
    %v149 = vunpack.c.l.b16 %v110
    %v150 = vunpack.c.l.b16 %v111
    %v151 = vunpack.c.l.b16 %v112
    %v152 = vunpack.c.l.b16 %v113
    %v153 = vunpack.c.l.b16 %v114
    %v154 = vunpack.c.l.b16 %v115
    %v155 = vpack.c.b16 %v140, %v139
    %v156 = vpack.c.b16 %v142, %v141
    %v157 = vpack.c.b16 %v144, %v143
    %v158 = vpack.c.b16 %v146, %v145
    %v159 = vpack.c.b16 %v148, %v147
    %v160 = vpack.c.b16 %v150, %v149
    %v161 = vpack.c.b16 %v152, %v151
    %v162 = vpack.c.b16 %v154, %v153
    %171 = vmatprep.subr.bf16.mxu0 0
    %172 = vmatpush1.bf16.msra.mxu0 %v162
    %173 = vmatprep.subr.bf16.mxu0 0
    %174 = vmatpush1.bf16.msra.mxu0 %v161
    %175 = vmatprep.subr.bf16.mxu0 0
    %176 = vmatpush1.bf16.msra.mxu0 %v160
    %177 = vmatprep.subr.bf16.mxu0 0
    %178 = vmatpush1.bf16.msra.mxu0 %v159
    %179 = vmatprep.subr.bf16.mxu0 0
    %180 = vmatpush1.bf16.msra.mxu0 %v158
    %181 = vmatprep.subr.bf16.mxu0 0
    %182 = vmatpush1.bf16.msra.mxu0 %v157
    %183 = vmatprep.subr.bf16.mxu0 0
    %184 = vmatpush1.bf16.msra.mxu0 %v156
    %185 = vmatprep.subr.bf16.mxu0 0
    %186 = vmatpush1.bf16.msra.mxu0 %v155
    %187 = vmatprep.subr.bf16.mxu0 0
    %188 = vmatpush2.bf16.msra.mxu0 0
    %189 = vmatprep.subr.bf16.mxu0 0
    %190 = vmatpush2.bf16.msra.mxu0 0
    %191 = vmatprep.subr.bf16.mxu0 0
    %192 = vmatpush2.bf16.msra.mxu0 0
    %193 = vmatprep.subr.bf16.mxu0 0
    %194 = vmatpush2.bf16.msra.mxu0 0
    %195 = vmatprep.subr.bf16.mxu0 0
    %196 = vmatpush2.bf16.msra.mxu0 0
    %197 = vmatprep.subr.bf16.mxu0 0
    %198 = vmatpush2.bf16.msra.mxu0 0
    %199 = vmatprep.subr.bf16.mxu0 0
    %200 = vmatpush2.bf16.msra.mxu0 0
    %201 = vmatprep.subr.bf16.mxu0 0
    %202 = vmatpush2.bf16.msra.mxu0 0
    %203 = vmatprep.mubr.bf16.mxu0 0
    %204 = vmatmul.mubr.bf16.gmra.mxu0 %v99
    %v205 = vpop.f32.mrf.mxu0
    %v206 = vadd.f32 %v121, %v205
    %v207 = vpop.f32.mrf.mxu0
    %v208 = vpop.f32.mrf.mxu0
    %v209 = vpop.f32.mrf.mxu0
    %210 = vdwg.mxu0
    %v211 = vmax.f32 %v206, 0.0
    %v212 = vpack.c.bf16 %v211, %v211
    %v213 = vld [vmem:[#allocation8] sm:$0xff]
    %v214 = vld [vmem:[#allocation8 + $0x8] sm:$0xff]
    %v215 = vld [vmem:[#allocation8 + $0x10] sm:$0xff]
    %v216 = vld [vmem:[#allocation8 + $0x18] sm:$0xff]
    %v217 = vld [vmem:[#allocation8 + $0x20] sm:$0xff]
    %v218 = vld [vmem:[#allocation8 + $0x28] sm:$0xff]
    %v219 = vld [vmem:[#allocation8 + $0x30] sm:$0xff]
    %v220 = vld [vmem:[#allocation8 + $0x38] sm:$0xff]
    %v221 = vld [vmem:[#allocation8 + $0x40] sm:$0xff]
    %v222 = vld [vmem:[#allocation8 + $0x48] sm:$0xff]
    %v223 = vld [vmem:[#allocation8 + $0x50] sm:$0xff]
    %v224 = vld [vmem:[#allocation8 + $0x58] sm:$0xff]
    %v225 = vld [vmem:[#allocation8 + $0x60] sm:$0xff]
    %v226 = vld [vmem:[#allocation8 + $0x68] sm:$0xff]
    %v227 = vld [vmem:[#allocation8 + $0x70] sm:$0xff]
    %v228 = vld [vmem:[#allocation8 + $0x78] sm:$0xff]
    %v229 = vld [vmem:[%s5] sm:$0x3]
    %v231 = vlaneseq
    %v232 = vshrl.u32 %v231, 7
    %v233 = vsub.s32 0, %v232
    %v234 = vrot.slane %v229, %v233
    %v235 = vlaneseq
    %v236 = vshrl.u32 %v235, 7
    %v237 = vsub.s32 1, %v236
    %v238 = vrot.slane %v229, %v237
    %v257 = vunpack.c.l.b16 %v213
    %v258 = vunpack.c.h.b16 %v213
    %v259 = vunpack.c.l.b16 %v214
    %v260 = vunpack.c.h.b16 %v214
    %v261 = vunpack.c.l.b16 %v215
    %v262 = vunpack.c.h.b16 %v215
    %v263 = vunpack.c.l.b16 %v216
    %v264 = vunpack.c.h.b16 %v216
    %v265 = vunpack.c.l.b16 %v217
    %v266 = vunpack.c.h.b16 %v217
    %v267 = vunpack.c.l.b16 %v218
    %v268 = vunpack.c.h.b16 %v218
    %v269 = vunpack.c.l.b16 %v219
    %v270 = vunpack.c.h.b16 %v219
    %v271 = vunpack.c.l.b16 %v220
    %v272 = vunpack.c.h.b16 %v220
    %v273 = vunpack.c.l.b16 %v221
    %v274 = vunpack.c.h.b16 %v221
    %v275 = vunpack.c.l.b16 %v222
    %v276 = vunpack.c.h.b16 %v222
    %v277 = vunpack.c.l.b16 %v223
    %v278 = vunpack.c.h.b16 %v223
    %v279 = vunpack.c.l.b16 %v224
    %v280 = vunpack.c.h.b16 %v224
    %v281 = vunpack.c.l.b16 %v225
    %v282 = vunpack.c.h.b16 %v225
    %v283 = vunpack.c.l.b16 %v226
    %v284 = vunpack.c.h.b16 %v226
    %v285 = vunpack.c.l.b16 %v227
    %v286 = vunpack.c.h.b16 %v227
    %v287 = vunpack.c.l.b16 %v228
    %v288 = vunpack.c.h.b16 %v228
    %v289 = vpack.c.b16 %v259, %v257
    %v290 = vpack.c.b16 %v260, %v258
    %v291 = vpack.c.b16 %v263, %v261
    %v292 = vpack.c.b16 %v264, %v262
    %v293 = vpack.c.b16 %v267, %v265
    %v294 = vpack.c.b16 %v268, %v266
    %v295 = vpack.c.b16 %v271, %v269
    %v296 = vpack.c.b16 %v272, %v270
    %v297 = vpack.c.b16 %v275, %v273
    %v298 = vpack.c.b16 %v276, %v274
    %v299 = vpack.c.b16 %v279, %v277
    %v300 = vpack.c.b16 %v280, %v278
    %v301 = vpack.c.b16 %v283, %v281
    %v302 = vpack.c.b16 %v284, %v282
    %v303 = vpack.c.b16 %v287, %v285
    %v304 = vpack.c.b16 %v288, %v286
    %321 = vmatprep.subr.bf16.mxu0 %v304
    %322 = vmatpush1.bf16.msra.mxu0 %v303
    %323 = vmatprep.subr.bf16.mxu0 %v302
    %324 = vmatpush1.bf16.msra.mxu0 %v301
    %325 = vmatprep.subr.bf16.mxu0 %v300
    %326 = vmatpush1.bf16.msra.mxu0 %v299
    %327 = vmatprep.subr.bf16.mxu0 %v298
    %328 = vmatpush1.bf16.msra.mxu0 %v297
    %329 = vmatprep.subr.bf16.mxu0 %v296
    %330 = vmatpush1.bf16.msra.mxu0 %v295
    %331 = vmatprep.subr.bf16.mxu0 %v294
    %332 = vmatpush1.bf16.msra.mxu0 %v293
    %333 = vmatprep.subr.bf16.mxu0 %v292
    %334 = vmatpush1.bf16.msra.mxu0 %v291
    %335 = vmatprep.subr.bf16.mxu0 %v290
    %336 = vmatpush1.bf16.msra.mxu0 %v289
    %337 = vmatprep.subr.bf16.mxu0 0
    %338 = vmatpush2.bf16.msra.mxu0 0
    %339 = vmatprep.subr.bf16.mxu0 0
    %340 = vmatpush2.bf16.msra.mxu0 0
    %341 = vmatprep.subr.bf16.mxu0 0
    %342 = vmatpush2.bf16.msra.mxu0 0
    %343 = vmatprep.subr.bf16.mxu0 0
    %344 = vmatpush2.bf16.msra.mxu0 0
    %345 = vmatprep.subr.bf16.mxu0 0
    %346 = vmatpush2.bf16.msra.mxu0 0
    %347 = vmatprep.subr.bf16.mxu0 0
    %348 = vmatpush2.bf16.msra.mxu0 0
    %349 = vmatprep.subr.bf16.mxu0 0
    %350 = vmatpush2.bf16.msra.mxu0 0
    %351 = vmatprep.subr.bf16.mxu0 0
    %352 = vmatpush2.bf16.msra.mxu0 0
    %353 = vmatprep.mubr.bf16.mxu0 0
    %354 = vmatmul.mubr.bf16.gmra.mxu0 %v212
    %v355 = vpop.f32.mrf.mxu0
    %v356 = vadd.f32 %v234, %v355
    %v357 = vpop.f32.mrf.mxu0
    %v358 = vadd.f32 %v238, %v357
    %v359 = vpop.f32.mrf.mxu0
    %v360 = vpop.f32.mrf.mxu0
    %361 = vdwg.mxu0
    %v362 = vmax.f32 %v358, 0.0
    %vm363 = vcmp.ne.f32.partialorder %v358, %v358
    %v364 = vadd.f32 %v358, 0.0
    %v365 = vand.u32 2147483647, %v358
    %v366 = vsub.f32 0.0, %v365
    %v367 = vmul.f32 %v366, 1.442695
    %v368 = vpow.pop %v367
    %v369 = vadd.f32 %v368, 1.0
    %v370 = vlog2.pop %v369
    %v371 = vmul.f32 %v370, 0.6931472
    %v372 = vmul.f32 -0.5, %v368
    %v373 = vadd.f32 %v372, 1.0
    %v374 = vmul.f32 %v373, %v368
    %v375 = vand.u32 2147483647, %v368
    %vm376 = vcmp.lt.f32.partialorder %v375, 0.0004427343
    %v377 = vsel %vm376, %v374, %v371
    %v378 = vadd.f32 %v362, %v377
    %v379 = vsel %vm363, %v364, %v378
    %v380 = vld [vmem:[#allocation5] sm:$0xff]
    %v381 = vmul.f32 %v380, %v379
    %v382 = vadd.f32 %v356, %v381
    %v383 = vpack.c.bf16 %v382, %v382
    %v384 = vld [vmem:[#allocation10] sm:$0xf]
    %v385 = vld [vmem:[#allocation10 + $0x4] sm:$0xf]
    %v386 = vld [vmem:[#allocation10 + $0x8] sm:$0xf]
    %v387 = vld [vmem:[#allocation10 + $0xc] sm:$0xf]
    %v388 = vld [vmem:[#allocation10 + $0x10] sm:$0xf]
    %v389 = vld [vmem:[#allocation10 + $0x14] sm:$0xf]
    %v390 = vld [vmem:[#allocation10 + $0x18] sm:$0xf]
    %v391 = vld [vmem:[#allocation10 + $0x1c] sm:$0xf]
    %v392 = vld [vmem:[#allocation10 + $0x20] sm:$0xf]
    %v393 = vld [vmem:[#allocation10 + $0x24] sm:$0xf]
    %v394 = vld [vmem:[#allocation10 + $0x28] sm:$0xf]
    %v395 = vld [vmem:[#allocation10 + $0x2c] sm:$0xf]
    %v396 = vld [vmem:[#allocation10 + $0x30] sm:$0xf]
    %v397 = vld [vmem:[#allocation10 + $0x34] sm:$0xf]
    %v398 = vld [vmem:[#allocation10 + $0x38] sm:$0xf]
    %v399 = vld [vmem:[#allocation10 + $0x3c] sm:$0xf]
    %v400 = vld [vmem:[%s7] sm:$0x1]
    %v402 = vlaneseq
    %v403 = vshrl.u32 %v402, 7
    %v404 = vsub.s32 0, %v403
    %v405 = vrot.slane %v400, %v404
    %v423 = vunpack.c.l.b16 %v384
    %v424 = vunpack.c.l.b16 %v385
    %v425 = vunpack.c.l.b16 %v386
    %v426 = vunpack.c.l.b16 %v387
    %v427 = vunpack.c.l.b16 %v388
    %v428 = vunpack.c.l.b16 %v389
    %v429 = vunpack.c.l.b16 %v390
    %v430 = vunpack.c.l.b16 %v391
    %v431 = vunpack.c.l.b16 %v392
    %v432 = vunpack.c.l.b16 %v393
    %v433 = vunpack.c.l.b16 %v394
    %v434 = vunpack.c.l.b16 %v395
    %v435 = vunpack.c.l.b16 %v396
    %v436 = vunpack.c.l.b16 %v397
    %v437 = vunpack.c.l.b16 %v398
    %v438 = vunpack.c.l.b16 %v399
    %v439 = vpack.c.b16 %v424, %v423
    %v440 = vpack.c.b16 %v426, %v425
    %v441 = vpack.c.b16 %v428, %v427
    %v442 = vpack.c.b16 %v430, %v429
    %v443 = vpack.c.b16 %v432, %v431
    %v444 = vpack.c.b16 %v434, %v433
    %v445 = vpack.c.b16 %v436, %v435
    %v446 = vpack.c.b16 %v438, %v437
    %455 = vmatprep.subr.bf16.mxu0 0
    %456 = vmatpush1.bf16.msra.mxu0 %v446
    %457 = vmatprep.subr.bf16.mxu0 0
    %458 = vmatpush1.bf16.msra.mxu0 %v445
    %459 = vmatprep.subr.bf16.mxu0 0
    %460 = vmatpush1.bf16.msra.mxu0 %v444
    %461 = vmatprep.subr.bf16.mxu0 0
    %462 = vmatpush1.bf16.msra.mxu0 %v443
    %463 = vmatprep.subr.bf16.mxu0 0
    %464 = vmatpush1.bf16.msra.mxu0 %v442
    %465 = vmatprep.subr.bf16.mxu0 0
    %466 = vmatpush1.bf16.msra.mxu0 %v441
    %467 = vmatprep.subr.bf16.mxu0 0
    %468 = vmatpush1.bf16.msra.mxu0 %v440
    %469 = vmatprep.subr.bf16.mxu0 0
    %470 = vmatpush1.bf16.msra.mxu0 %v439
    %471 = vmatprep.subr.bf16.mxu0 0
    %472 = vmatpush2.bf16.msra.mxu0 0
    %473 = vmatprep.subr.bf16.mxu0 0
    %474 = vmatpush2.bf16.msra.mxu0 0
    %475 = vmatprep.subr.bf16.mxu0 0
    %476 = vmatpush2.bf16.msra.mxu0 0
    %477 = vmatprep.subr.bf16.mxu0 0
    %478 = vmatpush2.bf16.msra.mxu0 0
    %479 = vmatprep.subr.bf16.mxu0 0
    %480 = vmatpush2.bf16.msra.mxu0 0
    %481 = vmatprep.subr.bf16.mxu0 0
    %482 = vmatpush2.bf16.msra.mxu0 0
    %483 = vmatprep.subr.bf16.mxu0 0
    %484 = vmatpush2.bf16.msra.mxu0 0
    %485 = vmatprep.subr.bf16.mxu0 0
    %486 = vmatpush2.bf16.msra.mxu0 0
    %487 = vmatprep.mubr.bf16.mxu0 0
    %488 = vmatmul.mubr.bf16.gmra.mxu0 %v383
    %v489 = vpop.f32.mrf.mxu0
    %v490 = vadd.f32 %v405, %v489
    %v491 = vpop.f32.mrf.mxu0
    %v492 = vpop.f32.mrf.mxu0
    %v493 = vpop.f32.mrf.mxu0
    %494 = vdwg.mxu0
    %495 = vst [vmem:[#allocation11] sm:$0xff] %v382
    %496 = vst [vmem:[#allocation11 + $0x8] sm:$0xff] %v356
    %497 = vst [vmem:[#allocation11 + $0x10] sm:$0xff] %v379
    %498 = vst [vmem:[#allocation12] sm:$0xff] %v490
    // Predicated region
    $region54: #{tpu_custom_call.1} parent=1 // pred_check
      _
    $region55: #{tpu_custom_call.1} parent=1 // pred_check_branch
      %500 = sbr.rel (0) target = $region57
    $region56: #{tpu_custom_call.1} parent=1 // pred_region
      %s502 = ssub.s32 384, 384
      %503 = vsyncadd [#allocation4], %s502
      %s505 = sshll.u32 [#allocation11], 4
      %s506 = int_to_ptr.vmem [resolvable:$true] %s505
      %508 = dma.vmem_to_hbm [thread:$0]  %s506, 384, %s8, [#allocation4]
    $region57: #{tpu_custom_call.1} parent=1 // pred_fallthru
      _
    // Predicated region
    $region58: #{tpu_custom_call.1} parent=1 // pred_check
      _
    $region59: #{tpu_custom_call.1} parent=1 // pred_check_branch
      %510 = sbr.rel (0) target = $region61
    $region60: #{tpu_custom_call.1} parent=1 // pred_region
      %s512 = ssub.s32 128, 128
      %513 = vsyncadd [#allocation13], %s512
      %s515 = sshll.u32 [#allocation12], 4
      %s516 = int_to_ptr.vmem [resolvable:$true] %s515
      %518 = dma.vmem_to_hbm [thread:$0]  %s516, 128, %s9, [#allocation13]
    $region61: #{tpu_custom_call.1} parent=1 // pred_fallthru
      _
    // Predicated region
    $region62: #{tpu_custom_call.1} parent=1 // pred_check
      _
    $region63: #{tpu_custom_call.1} parent=1 // pred_check_branch
      %520 = sbr.rel (0) target = $region65
    $region64: #{tpu_custom_call.1} parent=1 // pred_region
      %521 = dma.done [#allocation4], 384
    $region65: #{tpu_custom_call.1} parent=1 // pred_fallthru
      _
    // Predicated region
    $region66: #{tpu_custom_call.1} parent=1 // pred_check
      _
    $region67: #{tpu_custom_call.1} parent=1 // pred_check_branch
      %523 = sbr.rel (0) target = $region69
    $region68: #{tpu_custom_call.1} parent=1 // pred_region
      %524 = dma.done [#allocation13], 128
    $region69: #{tpu_custom_call.1} parent=1 // pred_fallthru
      _
    %525 = vsyncpa [#allocation3], 1
    %526 = vsyncpa [#allocation6], 1
    %527 = vsyncpa [#allocation9], 1
    %528 = vsyncpa [#allocation4], 1
    %529 = vsyncpa [#allocation13], 1

</llo_original>
